<compile_context>
chip_gen: v6e
topology: v6e:2x2x1
jax: 0.10.0
libtpu: 0.0.40
codegen_flags: <defaults>
</compile_context>

<pallas_src>
import functools

import numpy as np
import jax
import jax.numpy as jnp
from jax import lax
from jax.experimental import pallas as pl
from jax.experimental.pallas import tpu as pltpu

_SUBLANE = 8
_LANE = 128
_MAX_K_TILE = 4096       # general path: cap on the K (length) tile


def _cdiv(a: int, b: int) -> int:
    return -(-a // b)


def _round_up(x: int, m: int) -> int:
    return _cdiv(x, m) * m


def _query_vmem_capacity() -> int:
    try:
        return int(pltpu.get_tpu_info().vmem_capacity_bytes)
    except Exception:
        return 64 * 1024 * 1024          # conservative fallback (v7x-sized VMEM)


_VMEM_CAP = _query_vmem_capacity()
# Generation-aware budgets: ~96 MiB scoped limit on 128 MiB chips (v5e/v6e),
# ~48 MiB on v7x's 64 MiB VMEM.
_VMEM_LIMIT = int(min(_VMEM_CAP * 3 // 4, 96 * 1024 * 1024))
_X_BUDGET = int(max(4 << 20, min(_VMEM_CAP // 5, 24 << 20)))   # per-row-scaling buffers
_W_BUDGET = int(min(_VMEM_CAP // 5, 20 << 20))                 # weight buffers (x2)


def _padded_block_bytes(shape, itemsize: int) -> int:
    """VMEM bytes of ONE buffer of a block, incl. (sublane, lane) tile padding."""
    if len(shape) == 1:
        lead, s, l = (), 1, shape[0]
    else:
        lead, s, l = shape[:-2], shape[-2], shape[-1]
    sub = _SUBLANE * max(1, 4 // itemsize)       # 8 rows f32, 16 rows bf16, ...
    n = 1
    for d in lead:
        n *= int(d)
    return n * _round_up(max(int(s), 1), sub) * _round_up(int(l), _LANE) * itemsize


def _pick_batch_tile(batch: int, bytes_per_row: int, budget: int) -> int:
    """Rows per batch block (multiple of 8, sized to `budget`); keeps >= 2 blocks
    on the parallel batch axis when B >= 16 so v7x's two TensorCores both work."""
    if batch <= _SUBLANE:
        return batch                              # block == full (tiny) batch dim
    cap = max(_SUBLANE, (budget // max(bytes_per_row, 1)) // _SUBLANE * _SUBLANE)
    tm = min(cap, (batch // _SUBLANE) * _SUBLANE)
    if batch >= 2 * _SUBLANE:
        tm = min(tm, _round_up(_cdiv(batch, 2), _SUBLANE))
    return max(tm, _SUBLANE)


def _input_spec(block_shape, index_map, n_buffers: int = 2):
    """BlockSpec with optional deeper pipelining (falls back if unsupported)."""
    if n_buffers > 2:
        try:
            return pl.BlockSpec(block_shape, index_map,
                                pipeline_mode=pl.Buffered(n_buffers))
        except Exception:
            pass
    return pl.BlockSpec(block_shape, index_map)


# ---------------------------------------------------------------------------
# Path 1: L % P == 0, small window  ->  block-diagonal ones matmul on the MXU
# ---------------------------------------------------------------------------
@functools.lru_cache(maxsize=16)
def _window_ones(window: int, tp: int, dtype):
    """(window*tp, tp) block-diagonal 0/1 matrix: column c sums rows [c*W,(c+1)*W)."""
    r = np.arange(window * tp)[:, None]
    c = np.arange(tp)[None, :]
    m = (r // window == c).astype(np.float32)          # exact 0/1 in any dtype
    return jnp.asarray(m, dtype=dtype)


def _window_mean_kernel(x_ref, w_ref, o_ref, *, inv_window):
    s = jnp.dot(x_ref[...], w_ref[...], preferred_element_type=jnp.float32)
    o_ref[...] = (s * inv_window).astype(o_ref.dtype)


def _window_mean_config(b, l, p, isz):
    """Pick (tm, tp) for the block-diagonal path, or None if it does not fit."""
    window = l // p
    if p % _LANE == 0:
        cands = [d for d in range(_LANE, min(p, 512) + 1, _LANE) if p % d == 0]
    else:
        cands = [p]              # full-dim output block (no 128-multiple divisor of P)
    tp = None
    for d in cands:              # keep the widest candidate whose weight fits VMEM
        if 2 * _padded_block_bytes((window * d, d), isz) <= _W_BUDGET:
            tp = d
    if tp is None:
        return None
    tk = window * tp
    per_row = (2 * _round_up(tk, _LANE) + 2 * _round_up(tp, _LANE)) * isz   # x + out
    if per_row * min(b, _SUBLANE) > _X_BUDGET:
        return None
    tm = _pick_batch_tile(b, per_row, _X_BUDGET)
    return tm, tp


def _mean_pool_window(x, p, cfg, out_dtype):
    b, l = x.shape
    isz = x.dtype.itemsize
    window = l // p
    tm, tp = cfg
    tk = window * tp
    w = _window_ones(window, tp, x.dtype)
    grid = (_cdiv(b, tm), p // tp)
    x_blk = _padded_block_bytes((tm, tk), isz)
    other = (2 * _padded_block_bytes((tk, tp), isz)
             + 2 * _padded_block_bytes((tm, tp), isz))
    n_buf = 3 if (grid[0] * grid[1] >= 3
                  and 3 * x_blk + other + (2 << 20) <= int(_VMEM_LIMIT * 0.9)) else 2
    kernel = functools.partial(_window_mean_kernel, inv_window=1.0 / window)
    return pl.pallas_call(
        kernel,
        out_shape=jax.ShapeDtypeStruct((b, p), out_dtype),
        grid_spec=pltpu.PrefetchScalarGridSpec(
            num_scalar_prefetch=0,
            grid=grid,
            in_specs=[
                _input_spec((tm, tk), lambda i, j: (i, j), n_buf),
                pl.BlockSpec((tk, tp), lambda i, j: (0, 0)),   # constant -> fetched once
            ],
            out_specs=pl.BlockSpec((tm, tp), lambda i, j: (i, j)),
        ),
        compiler_params=pltpu.CompilerParams(
            dimension_semantics=("parallel", "parallel"),
            vmem_limit_bytes=_VMEM_LIMIT,
        ),
        cost_estimate=pl.CostEstimate(
            flops=2 * b * l,
            transcendentals=0,
            bytes_accessed=b * l * isz + tk * tp * isz + b * p * isz,
        ),
    )(x, w)


# ---------------------------------------------------------------------------
# Path 2: L % P == 0, large window (W >= 128)  ->  (B, P, W) mean over lane axis
# ---------------------------------------------------------------------------
def _reshape_mean_kernel(x_ref, o_ref, acc_ref, *, window, w_tile):
    k = pl.program_id(1)
    num_k = _cdiv(window, w_tile)

    @pl.when(k == 0)
    def _init():
        acc_ref[...] = jnp.zeros_like(acc_ref)

    def _accum(mask_tail):
        xv = x_ref[...].astype(jnp.float32)                 # upcast in-register only
        if mask_tail:
            col = k * w_tile + lax.broadcasted_iota(jnp.int32, x_ref.shape, 2)
            xv = jnp.where(col < window, xv, 0.0)
        acc_ref[...] += jnp.sum(xv, axis=-1)

    if window % w_tile != 0:
        @pl.when(k == num_k - 1)                 # mask only the ragged tail block
        def _tail():
            _accum(True)

        @pl.when(k < num_k - 1)
        def _body():
            _accum(False)
    else:
        _accum(False)

    @pl.when(k == num_k - 1)
    def _fin():
        o_ref[...] = (acc_ref[...] * (1.0 / window)).astype(o_ref.dtype)


def _mean_pool_reshape(x, p, out_dtype):
    b, l = x.shape
    isz = x.dtype.itemsize
    window = l // p
    xr = x.reshape(b, p, window)                 # row-major relayout, free in HBM
    sub = _SUBLANE * max(1, 4 // isz)
    p_pad = _round_up(p, sub)
    tw_cap = (3 * _X_BUDGET // 4) // max(1, 2 * min(b, _SUBLANE) * p_pad * isz)
    tw_cap = max(_LANE, (tw_cap // _LANE) * _LANE)
    tw = window if window <= tw_cap else tw_cap
    per_row = (2 * p_pad * _round_up(tw, _LANE) * isz       # x (both buffers)
               + _round_up(p, _LANE) * 4                    # f32 accumulator
               + 2 * _round_up(p, _LANE) * isz)             # output (both buffers)
    tm = _pick_batch_tile(b, per_row, _X_BUDGET)
    grid = (_cdiv(b, tm), _cdiv(window, tw))
    x_blk = _padded_block_bytes((tm, p, tw), isz)
    n_buf = 3 if (grid[0] * grid[1] >= 3
                  and 3 * x_blk + 3 * _padded_block_bytes((tm, p), 4) + (2 << 20)
                  <= int(_VMEM_LIMIT * 0.9)) else 2
    kernel = functools.partial(_reshape_mean_kernel, window=window, w_tile=tw)
    return pl.pallas_call(
        kernel,
        out_shape=jax.ShapeDtypeStruct((b, p), out_dtype),
        grid_spec=pltpu.PrefetchScalarGridSpec(
            num_scalar_prefetch=0,
            grid=grid,
            in_specs=[_input_spec((tm, p, tw), lambda i, k: (i, 0, k), n_buf)],
            out_specs=pl.BlockSpec((tm, p), lambda i, k: (i, 0)),
            scratch_shapes=[pltpu.VMEM((tm, p), jnp.float32)],
        ),
        compiler_params=pltpu.CompilerParams(
            dimension_semantics=("parallel", "arbitrary"),
            vmem_limit_bytes=_VMEM_LIMIT,
        ),
        cost_estimate=pl.CostEstimate(
            flops=b * l + b * p,
            transcendentals=0,
            bytes_accessed=b * l * isz + b * p * isz,
        ),
    )(xr)


# ---------------------------------------------------------------------------
# Path 3: L % P != 0  ->  (B, L) @ (L, P) 0/1 window mask, per-column 1/width scale
# ---------------------------------------------------------------------------
@functools.lru_cache(maxsize=16)
def _adaptive_pool_tables(length: int, out_dim: int, l_pad: int, dtype):
    """0/1 window mask (L_pad, P) in `dtype` (exact) + per-column 1/width (1, P) f32."""
    i = np.arange(out_dim)
    starts = (i * length) // out_dim                        # floor(i*L/P)
    ends = -((-(i + 1) * length) // out_dim)                # ceil((i+1)*L/P)
    j = np.arange(l_pad)[:, None]
    mask = ((j >= starts[None, :]) & (j < ends[None, :])).astype(np.float32)
    w = jnp.asarray(mask, dtype=dtype)                      # rows >= L are all-zero
    inv = jnp.asarray((1.0 / (ends - starts)).reshape(1, out_dim).astype(np.float32))
    return w, inv


def _adaptive_pool_kernel(x_ref, w_ref, inv_ref, o_ref, acc_ref, *,
                          length, k_tile, resident_w):
    k = pl.program_id(1)
    num_k = _cdiv(length, k_tile)

    @pl.when(k == 0)
    def _init():
        acc_ref[...] = jnp.zeros_like(acc_ref)

    def _w_block():
        if resident_w and num_k > 1:
            start = k * k_tile
            if k_tile % _LANE == 0:
                start = pl.multiple_of(start, _LANE)
            return w_ref[pl.ds(start, k_tile), :]
        return w_ref[...]

    def _accum(xv):
        acc_ref[...] += jnp.dot(xv, _w_block(), preferred_element_type=jnp.float32)

    if length % k_tile != 0:
        @pl.when(k == num_k - 1)        # mask the ragged K tail of x in-kernel (no jnp.pad)
        def _tail():
            col = k * k_tile + lax.broadcasted_iota(jnp.int32, x_ref.shape, 1)
            _accum(jnp.where(col < length, x_ref[...], 0.0).astype(x_ref.dtype))

        @pl.when(k < num_k - 1)
        def _body():
            _accum(x_ref[...])
    else:
        _accum(x_ref[...])

    @pl.when(k == num_k - 1)
    def _fin():
        o_ref[...] = (acc_ref[...] * inv_ref[...]).astype(o_ref.dtype)


def _mean_pool_general(x, p, out_dtype):
    b, l = x.shape
    isz = x.dtype.itemsize
    # K tile bounded by both a hard cap and the double-buffered (tk, P) weight block.
    tk = min(_MAX_K_TILE,
             max(_LANE,
                 (_W_BUDGET // max(1, 2 * _round_up(p, _LANE) * isz)) // _LANE * _LANE))
    if l <= tk:
        tk = l
    l_pad = _round_up(l, tk)
    w, inv = _adaptive_pool_tables(l, p, l_pad, x.dtype)
    resident_w = 2 * _padded_block_bytes((l_pad, p), isz) <= _W_BUDGET
    per_row = (2 * _round_up(tk, _LANE) * isz               # x (both buffers)
               + _round_up(p, _LANE) * 4                    # f32 accumulator
               + 2 * _round_up(p, _LANE) * isz)             # output (both buffers)
    tm = _pick_batch_tile(b, per_row, _X_BUDGET)
    grid = (_cdiv(b, tm), _cdiv(l, tk))
    if resident_w:
        # Whole mask resident in VMEM: fetched from HBM once for the entire call.
        w_spec = pl.BlockSpec((l_pad, p), lambda i, k: (0, 0))
    else:
        w_spec = pl.BlockSpec((tk, p), lambda i, k: (k, 0))
    kernel = functools.partial(_adaptive_pool_kernel, length=l, k_tile=tk,
                               resident_w=resident_w)
    w_traffic = l_pad * p * isz * (1 if resident_w else grid[0])
    return pl.pallas_call(
        kernel,
        out_shape=jax.ShapeDtypeStruct((b, p), out_dtype),
        grid_spec=pltpu.PrefetchScalarGridSpec(
            num_scalar_prefetch=0,
            grid=grid,
            in_specs=[
                pl.BlockSpec((tm, tk), lambda i, k: (i, k)),
                w_spec,
                pl.BlockSpec((1, p), lambda i, k: (0, 0)),
            ],
            out_specs=pl.BlockSpec((tm, p), lambda i, k: (i, 0)),
            scratch_shapes=[pltpu.VMEM((tm, p), jnp.float32)],
        ),
        compiler_params=pltpu.CompilerParams(
            dimension_semantics=("parallel", "arbitrary"),
            vmem_limit_bytes=_VMEM_LIMIT,
        ),
        cost_estimate=pl.CostEstimate(
            flops=2 * b * l_pad * p,
            transcendentals=0,
            bytes_accessed=b * l * isz + w_traffic + b * p * isz,
        ),
    )(x, w, inv)


# ---------------------------------------------------------------------------
# Public wrapper
# ---------------------------------------------------------------------------
def mean_mapper(features: jnp.ndarray, preprocessing_dim: int) -> jnp.ndarray:
    """Pallas implementation of MeanMapper.forward -> (B, preprocessing_dim)."""
    # TODO(synk): the original module's trailing `.cuda()` is a device-placement
    # call with no kernel equivalent; results stay on the default JAX (TPU) device.
    p = int(preprocessing_dim)
    b = features.shape[0]
    x = features.reshape(b, -1)
    if x.dtype.name not in ("float32", "bfloat16"):
        # Uncommon dtypes (fp16/int/...) get one upcast pass; f32/bf16 stream natively.
        x = x.astype(jnp.float32)
    out_dtype = x.dtype
    l = x.shape[1]
    isz = x.dtype.itemsize
    if l % p == 0:
        window = l // p
        if window < _LANE:
            cfg = _window_mean_config(b, l, p, isz)
            if cfg is not None:
                return _mean_pool_window(x, p, cfg, out_dtype)
        if window >= 32:                 # >= 25% lane utilisation on the window axis
            return _mean_pool_reshape(x, p, out_dtype)
    return _mean_pool_general(x, p, out_dtype)


# ---------------------------------------------------------------------------
# Reference + smoke test
# ---------------------------------------------------------------------------
def _reference(features, preprocessing_dim: int) -> np.ndarray:
    """Pure-numpy reference matching F.adaptive_avg_pool1d semantics."""
    x = np.asarray(features, dtype=np.float32)
    b = x.shape[0]
    x = x.reshape(b, -1)
    l = x.shape[1]
    out = np.zeros((b, preprocessing_dim), dtype=np.float32)
    for i in range(preprocessing_dim):
        s = (i * l) // preprocessing_dim
        e = -((-(i + 1) * l) // preprocessing_dim)
        out[:, i] = x[:, s:e].mean(axis=1)
    return out


if __name__ == "__main__":
    preprocessing_dim = 32
    key = jax.random.PRNGKey(0)

    # 1) Divisible L with a small window (W = 1024/32 = 32): block-diagonal MXU path.
    f1 = jax.random.normal(key, (2, 4, 16, 16), dtype=jnp.float32)
    o1 = jax.block_until_ready(mean_mapper(f1, preprocessing_dim))
    np.testing.assert_allclose(np.asarray(o1), _reference(f1, preprocessing_dim),
                               rtol=1e-4, atol=1e-5)

    # 2) Non-divisible L = 3*5*7 = 105: general adaptive-pool (mask matmul) path.
    f2 = jax.random.normal(key, (2, 3, 5, 7), dtype=jnp.float32)
    o2 = jax.block_until_ready(mean_mapper(f2, preprocessing_dim))
    np.testing.assert_allclose(np.asarray(o2), _reference(f2, preprocessing_dim),
                               rtol=1e-4, atol=1e-5)

    # 3) Divisible L with a large window (W = 1024/8 = 128): reshape-mean path.
    f3 = jax.random.normal(key, (2, 256, 2, 2), dtype=jnp.float32)
    o3 = jax.block_until_ready(mean_mapper(f3, 8))
    np.testing.assert_allclose(np.asarray(o3), _reference(f3, 8), rtol=1e-4, atol=1e-5)

    print("KERNEL_OK")
</pallas_src>

<mosaic_0001>
module attributes {stable_mosaic.version = 11 : i64} {
  func.func @_window_mean_kernel(%arg0: i32, %arg1: i32, %arg2: memref<2x1024xf32, #tpu.memory_space<vmem>>, %arg3: memref<1024x32xf32, #tpu.memory_space<vmem>>, %arg4: memref<2x32xf32, #tpu.memory_space<vmem>>) attributes {dimension_semantics = [#tpu.dimension_semantics<parallel>, #tpu.dimension_semantics<parallel>], iteration_bounds = array<i64: 1, 1>, scalar_prefetch = 0 : i64, scratch_operands = 0 : i64, tpu.core_type = #tpu.core_type<tc>, window_params = [{transform_indices = @transform_0, window_bounds = array<i64: 2, 1024>}, {pipeline_mode = #tpu.pipeline_mode<synchronous>, transform_indices = @transform_1, window_bounds = array<i64: 1024, 32>}, {transform_indices = @transform_2, window_bounds = array<i64: 2, 32>}]} {
    %c0 = arith.constant 0 : index
    %c0_0 = arith.constant 0 : index
    %0 = vector.load %arg2[%c0, %c0_0] : memref<2x1024xf32, #tpu.memory_space<vmem>>, vector<2x1024xf32>
    %c0_1 = arith.constant 0 : index
    %c0_2 = arith.constant 0 : index
    %1 = vector.load %arg3[%c0_1, %c0_2] : memref<1024x32xf32, #tpu.memory_space<vmem>>, vector<1024x32xf32>
    %cst = arith.constant dense<0.000000e+00> : vector<2x32xf32>
    %2 = tpu.matmul %0, %1, %cst {dimension_numbers = #tpu.dot_dimension_numbers<[1], [0], [0], [1], [0, 0, 1, 1], [], []>} : vector<2x1024xf32>, vector<1024x32xf32>, vector<2x32xf32> -> vector<2x32xf32>
    %cst_3 = arith.constant 3.125000e-02 : f32
    %3 = vector.broadcast %cst_3 : f32 to vector<2x32xf32>
    %4 = arith.mulf %2, %3 : vector<2x32xf32>
    %c0_4 = arith.constant 0 : index
    %c0_5 = arith.constant 0 : index
    %5 = vector.load %arg4[%c0_4, %c0_5] : memref<2x32xf32, #tpu.memory_space<vmem>>, vector<2x32xf32>
    tpu.vector_store %arg4[%c0_4, %c0_5], %4 {strides = array<i32>} : memref<2x32xf32, #tpu.memory_space<vmem>>, vector<2x32xf32>,
    return
  }
  func.func @transform_0(%arg0: i32, %arg1: i32) -> (i32, i32) {
    %c0_i32 = arith.constant 0 : i32
    return %arg0, %arg1 : i32, i32
  }
  func.func @transform_1(%arg0: i32, %arg1: i32) -> (i32, i32) {
    %c0_i32 = arith.constant 0 : i32
    %c0_i32_0 = arith.constant 0 : i32
    %c0_i32_1 = arith.constant 0 : i32
    return %c0_i32, %c0_i32_0 : i32, i32
  }
  func.func @transform_2(%arg0: i32, %arg1: i32) -> (i32, i32) {
    %c0_i32 = arith.constant 0 : i32
    return %arg0, %arg1 : i32, i32
  }
}

</mosaic_0001>

<llo_original>
// kernel: tpu_custom_call.1
$region0: #{tpu_custom_call.1}
  #allocation0 [shape = 'u32[]', space=smem, size = 0x4, offset = 0x4, fixed_abs, tag = 'smem constant byte address 0x4 - core index']
  #allocation1 [shape = 'u32[144,128]{1,0:T(1,128)}', space=vmem, size = 0x12000, scoped, tag = 'internal scratch']
  %s0 = inlined_call_operand.vmem [shape: f32[2,1024], index: 0, kind: input, shape index: {}]
  %s1 = inlined_call_operand.vmem [shape: f32[1024,32], index: 1, kind: input, shape index: {}]
  %s2 = inlined_call_operand.hbm [shape: f32[2,32], index: 2, kind: output, shape index: {}]
  %s3 = sld [smem:[#allocation0]]
  $region18: #{tpu_custom_call.1} parent=0
    _
  %s5 = ssub.s32 1, %s3
  %s6 = scalar_select 0, %s5, %s3
  $region1: #{tpu_custom_call.1} parent=0
    #allocation2 [shape = 'u8[1024]{0}', space=vmem, size = 0x400, scoped, tag = 'output window, operand 0, single buffered']
    #allocation3 [shape = 's32[1]{0}', space=sflag, size = 0x4, scoped, tag = 'scoped memory for tpu_custom_call.1']
    %7 = vsyncpa [#allocation3], 0
    // Predicated region
    $region2: #{tpu_custom_call.1} parent=1 // pred_check
      _
    $region3: #{tpu_custom_call.1} parent=1 // pred_check_branch
      %9 = sbr.rel (0) target = $region5
    $region4: #{tpu_custom_call.1} parent=1 // pred_region
      _
    $region5: #{tpu_custom_call.1} parent=1 // pred_fallthru
      _
    // Predicated region
    $region6: #{tpu_custom_call.1} parent=1 // pred_check
      _
    $region7: #{tpu_custom_call.1} parent=1 // pred_check_branch
      %11 = sbr.rel (0) target = $region9
    $region8: #{tpu_custom_call.1} parent=1 // pred_region
      _
    $region9: #{tpu_custom_call.1} parent=1 // pred_fallthru
      _
    %v12 = vld [vmem:[%s0] sm:$0xff]
    %v13 = vld [vmem:[%s0 + $0x8] sm:$0xff]
    %v14 = vld [vmem:[%s1] sm:$0xff]
    %v15 = vld [vmem:[%s1 + $0x8] sm:$0xff]
    %v16 = vld [vmem:[%s1 + $0x10] sm:$0xff]
    %v17 = vld [vmem:[%s1 + $0x18] sm:$0xff]
    %v18 = vld [vmem:[%s1 + $0x20] sm:$0xff]
    %v19 = vld [vmem:[%s1 + $0x28] sm:$0xff]
    %v20 = vld [vmem:[%s1 + $0x30] sm:$0xff]
    %v21 = vld [vmem:[%s1 + $0x38] sm:$0xff]
    %v22 = vld [vmem:[%s1 + $0x40] sm:$0xff]
    %v23 = vld [vmem:[%s1 + $0x48] sm:$0xff]
    %v24 = vld [vmem:[%s1 + $0x50] sm:$0xff]
    %v25 = vld [vmem:[%s1 + $0x58] sm:$0xff]
    %v26 = vld [vmem:[%s1 + $0x60] sm:$0xff]
    %v27 = vld [vmem:[%s1 + $0x68] sm:$0xff]
    %v28 = vld [vmem:[%s1 + $0x70] sm:$0xff]
    %v29 = vld [vmem:[%s1 + $0x78] sm:$0xff]
    %v30 = vld [vmem:[%s1 + $0x80] sm:$0xff]
    %v31 = vld [vmem:[%s1 + $0x88] sm:$0xff]
    %v32 = vld [vmem:[%s1 + $0x90] sm:$0xff]
    %v33 = vld [vmem:[%s1 + $0x98] sm:$0xff]
    %v34 = vld [vmem:[%s1 + $0xa0] sm:$0xff]
    %v35 = vld [vmem:[%s1 + $0xa8] sm:$0xff]
    %v36 = vld [vmem:[%s1 + $0xb0] sm:$0xff]
    %v37 = vld [vmem:[%s1 + $0xb8] sm:$0xff]
    %v38 = vld [vmem:[%s1 + $0xc0] sm:$0xff]
    %v39 = vld [vmem:[%s1 + $0xc8] sm:$0xff]
    %v40 = vld [vmem:[%s1 + $0xd0] sm:$0xff]
    %v41 = vld [vmem:[%s1 + $0xd8] sm:$0xff]
    %v42 = vld [vmem:[%s1 + $0xe0] sm:$0xff]
    %v43 = vld [vmem:[%s1 + $0xe8] sm:$0xff]
    %v44 = vld [vmem:[%s1 + $0xf0] sm:$0xff]
    %v45 = vld [vmem:[%s1 + $0xf8] sm:$0xff]
    %v46 = vld [vmem:[%s1 + $0x100] sm:$0xff]
    %v47 = vld [vmem:[%s1 + $0x108] sm:$0xff]
    %v48 = vld [vmem:[%s1 + $0x110] sm:$0xff]
    %v49 = vld [vmem:[%s1 + $0x118] sm:$0xff]
    %v50 = vld [vmem:[%s1 + $0x120] sm:$0xff]
    %v51 = vld [vmem:[%s1 + $0x128] sm:$0xff]
    %v52 = vld [vmem:[%s1 + $0x130] sm:$0xff]
    %v53 = vld [vmem:[%s1 + $0x138] sm:$0xff]
    %v54 = vld [vmem:[%s1 + $0x140] sm:$0xff]
    %v55 = vld [vmem:[%s1 + $0x148] sm:$0xff]
    %v56 = vld [vmem:[%s1 + $0x150] sm:$0xff]
    %v57 = vld [vmem:[%s1 + $0x158] sm:$0xff]
    %v58 = vld [vmem:[%s1 + $0x160] sm:$0xff]
    %v59 = vld [vmem:[%s1 + $0x168] sm:$0xff]
    %v60 = vld [vmem:[%s1 + $0x170] sm:$0xff]
    %v61 = vld [vmem:[%s1 + $0x178] sm:$0xff]
    %v62 = vld [vmem:[%s1 + $0x180] sm:$0xff]
    %v63 = vld [vmem:[%s1 + $0x188] sm:$0xff]
    %v64 = vld [vmem:[%s1 + $0x190] sm:$0xff]
    %v65 = vld [vmem:[%s1 + $0x198] sm:$0xff]
    %v66 = vld [vmem:[%s1 + $0x1a0] sm:$0xff]
    %v67 = vld [vmem:[%s1 + $0x1a8] sm:$0xff]
    %v68 = vld [vmem:[%s1 + $0x1b0] sm:$0xff]
    %v69 = vld [vmem:[%s1 + $0x1b8] sm:$0xff]
    %v70 = vld [vmem:[%s1 + $0x1c0] sm:$0xff]
    %v71 = vld [vmem:[%s1 + $0x1c8] sm:$0xff]
    %v72 = vld [vmem:[%s1 + $0x1d0] sm:$0xff]
    %v73 = vld [vmem:[%s1 + $0x1d8] sm:$0xff]
    %v74 = vld [vmem:[%s1 + $0x1e0] sm:$0xff]
    %v75 = vld [vmem:[%s1 + $0x1e8] sm:$0xff]
    %v76 = vld [vmem:[%s1 + $0x1f0] sm:$0xff]
    %v77 = vld [vmem:[%s1 + $0x1f8] sm:$0xff]
    %v78 = vld [vmem:[%s1 + $0x200] sm:$0xff]
    %v79 = vld [vmem:[%s1 + $0x208] sm:$0xff]
    %v80 = vld [vmem:[%s1 + $0x210] sm:$0xff]
    %v81 = vld [vmem:[%s1 + $0x218] sm:$0xff]
    %v82 = vld [vmem:[%s1 + $0x220] sm:$0xff]
    %v83 = vld [vmem:[%s1 + $0x228] sm:$0xff]
    %v84 = vld [vmem:[%s1 + $0x230] sm:$0xff]
    %v85 = vld [vmem:[%s1 + $0x238] sm:$0xff]
    %v86 = vld [vmem:[%s1 + $0x240] sm:$0xff]
    %v87 = vld [vmem:[%s1 + $0x248] sm:$0xff]
    %v88 = vld [vmem:[%s1 + $0x250] sm:$0xff]
    %v89 = vld [vmem:[%s1 + $0x258] sm:$0xff]
    %v90 = vld [vmem:[%s1 + $0x260] sm:$0xff]
    %v91 = vld [vmem:[%s1 + $0x268] sm:$0xff]
    %v92 = vld [vmem:[%s1 + $0x270] sm:$0xff]
    %v93 = vld [vmem:[%s1 + $0x278] sm:$0xff]
    %v94 = vld [vmem:[%s1 + $0x280] sm:$0xff]
    %v95 = vld [vmem:[%s1 + $0x288] sm:$0xff]
    %v96 = vld [vmem:[%s1 + $0x290] sm:$0xff]
    %v97 = vld [vmem:[%s1 + $0x298] sm:$0xff]
    %v98 = vld [vmem:[%s1 + $0x2a0] sm:$0xff]
    %v99 = vld [vmem:[%s1 + $0x2a8] sm:$0xff]
    %v100 = vld [vmem:[%s1 + $0x2b0] sm:$0xff]
    %v101 = vld [vmem:[%s1 + $0x2b8] sm:$0xff]
    %v102 = vld [vmem:[%s1 + $0x2c0] sm:$0xff]
    %v103 = vld [vmem:[%s1 + $0x2c8] sm:$0xff]
    %v104 = vld [vmem:[%s1 + $0x2d0] sm:$0xff]
    %v105 = vld [vmem:[%s1 + $0x2d8] sm:$0xff]
    %v106 = vld [vmem:[%s1 + $0x2e0] sm:$0xff]
    %v107 = vld [vmem:[%s1 + $0x2e8] sm:$0xff]
    %v108 = vld [vmem:[%s1 + $0x2f0] sm:$0xff]
    %v109 = vld [vmem:[%s1 + $0x2f8] sm:$0xff]
    %v110 = vld [vmem:[%s1 + $0x300] sm:$0xff]
    %v111 = vld [vmem:[%s1 + $0x308] sm:$0xff]
    %v112 = vld [vmem:[%s1 + $0x310] sm:$0xff]
    %v113 = vld [vmem:[%s1 + $0x318] sm:$0xff]
    %v114 = vld [vmem:[%s1 + $0x320] sm:$0xff]
    %v115 = vld [vmem:[%s1 + $0x328] sm:$0xff]
    %v116 = vld [vmem:[%s1 + $0x330] sm:$0xff]
    %v117 = vld [vmem:[%s1 + $0x338] sm:$0xff]
    %v118 = vld [vmem:[%s1 + $0x340] sm:$0xff]
    %v119 = vld [vmem:[%s1 + $0x348] sm:$0xff]
    %v120 = vld [vmem:[%s1 + $0x350] sm:$0xff]
    %v121 = vld [vmem:[%s1 + $0x358] sm:$0xff]
    %v122 = vld [vmem:[%s1 + $0x360] sm:$0xff]
    %v123 = vld [vmem:[%s1 + $0x368] sm:$0xff]
    %v124 = vld [vmem:[%s1 + $0x370] sm:$0xff]
    %v125 = vld [vmem:[%s1 + $0x378] sm:$0xff]
    %v126 = vld [vmem:[%s1 + $0x380] sm:$0xff]
    %v127 = vld [vmem:[%s1 + $0x388] sm:$0xff]
    %v128 = vld [vmem:[%s1 + $0x390] sm:$0xff]
    %v129 = vld [vmem:[%s1 + $0x398] sm:$0xff]
    %v130 = vld [vmem:[%s1 + $0x3a0] sm:$0xff]
    %v131 = vld [vmem:[%s1 + $0x3a8] sm:$0xff]
    %v132 = vld [vmem:[%s1 + $0x3b0] sm:$0xff]
    %v133 = vld [vmem:[%s1 + $0x3b8] sm:$0xff]
    %v134 = vld [vmem:[%s1 + $0x3c0] sm:$0xff]
    %v135 = vld [vmem:[%s1 + $0x3c8] sm:$0xff]
    %v136 = vld [vmem:[%s1 + $0x3d0] sm:$0xff]
    %v137 = vld [vmem:[%s1 + $0x3d8] sm:$0xff]
    %v138 = vld [vmem:[%s1 + $0x3e0] sm:$0xff]
    %v139 = vld [vmem:[%s1 + $0x3e8] sm:$0xff]
    %v140 = vld [vmem:[%s1 + $0x3f0] sm:$0xff]
    %v141 = vld [vmem:[%s1 + $0x3f8] sm:$0xff]
    %v144 = vcombine.high %v12, %v12
    %v146 = vunpack.c.l.s4 1983009808
    %v147 = vunpack.c.0.s8 %v146
    %v148 = vlaneseq
    %v149 = vshrl.u32 %v148, 7
    %v150 = vsub.s32 %v147, %v149
    %v151 = vrot.slane %v12, %v150
    %v153 = vunpack.c.l.s4 1983009808
    %v154 = vunpack.c.0.s8 %v153
    %v155 = vlaneseq
    %v156 = vshrl.u32 %v155, 7
    %v157 = vsub.s32 %v154, %v156
    %v158 = vrot.slane %v144, %v157
    %v159 = vcombine.high %v151, %v151
    %v160 = vcombine.high %v158, %v158
    %v161 = vcombine.high %v13, %v13
    %v163 = vunpack.c.l.s4 1983009808
    %v164 = vunpack.c.0.s8 %v163
    %v165 = vlaneseq
    %v166 = vshrl.u32 %v165, 7
    %v167 = vsub.s32 %v164, %v166
    %v168 = vrot.slane %v13, %v167
    %v170 = vunpack.c.l.s4 1983009808
    %v171 = vunpack.c.0.s8 %v170
    %v172 = vlaneseq
    %v173 = vshrl.u32 %v172, 7
    %v174 = vsub.s32 %v171, %v173
    %v175 = vrot.slane %v161, %v174
    %v176 = vcombine.high %v168, %v168
    %v177 = vcombine.high %v175, %v175
    %186 = vmatprep.subr.mxu0 0.0
    %187 = vmatpush1.msra.mxu0 %v29
    %188 = vmatprep.subr.mxu0 0.0
    %189 = vmatpush1.msra.mxu0 %v28
    %190 = vmatprep.subr.mxu0 0.0
    %191 = vmatpush1.msra.mxu0 %v27
    %192 = vmatprep.subr.mxu0 0.0
    %193 = vmatpush1.msra.mxu0 %v26
    %194 = vmatprep.subr.mxu0 0.0
    %195 = vmatpush1.msra.mxu0 %v25
    %196 = vmatprep.subr.mxu0 0.0
    %197 = vmatpush1.msra.mxu0 %v24
    %198 = vmatprep.subr.mxu0 0.0
    %199 = vmatpush1.msra.mxu0 %v23
    %200 = vmatprep.subr.mxu0 0.0
    %201 = vmatpush1.msra.mxu0 %v22
    %202 = vmatprep.subr.mxu0 0.0
    %203 = vmatpush1.msra.mxu0 %v21
    %204 = vmatprep.subr.mxu0 0.0
    %205 = vmatpush1.msra.mxu0 %v20
    %206 = vmatprep.subr.mxu0 0.0
    %207 = vmatpush1.msra.mxu0 %v19
    %208 = vmatprep.subr.mxu0 0.0
    %209 = vmatpush1.msra.mxu0 %v18
    %210 = vmatprep.subr.mxu0 0.0
    %211 = vmatpush1.msra.mxu0 %v17
    %212 = vmatprep.subr.mxu0 0.0
    %213 = vmatpush1.msra.mxu0 %v16
    %214 = vmatprep.subr.mxu0 0.0
    %215 = vmatpush1.msra.mxu0 %v15
    %216 = vmatprep.subr.mxu0 0.0
    %217 = vmatpush1.msra.mxu0 %v14
    %218 = vmatprep.subr.mxu0 0.0
    %219 = vmatpush2.msra.mxu0 %v45
    %220 = vmatprep.subr.mxu0 0.0
    %221 = vmatpush2.msra.mxu0 %v44
    %222 = vmatprep.subr.mxu0 0.0
    %223 = vmatpush2.msra.mxu0 %v43
    %224 = vmatprep.subr.mxu0 0.0
    %225 = vmatpush2.msra.mxu0 %v42
    %226 = vmatprep.subr.mxu0 0.0
    %227 = vmatpush2.msra.mxu0 %v41
    %228 = vmatprep.subr.mxu0 0.0
    %229 = vmatpush2.msra.mxu0 %v40
    %230 = vmatprep.subr.mxu0 0.0
    %231 = vmatpush2.msra.mxu0 %v39
    %232 = vmatprep.subr.mxu0 0.0
    %233 = vmatpush2.msra.mxu0 %v38
    %234 = vmatprep.subr.mxu0 0.0
    %235 = vmatpush2.msra.mxu0 %v37
    %236 = vmatprep.subr.mxu0 0.0
    %237 = vmatpush2.msra.mxu0 %v36
    %238 = vmatprep.subr.mxu0 0.0
    %239 = vmatpush2.msra.mxu0 %v35
    %240 = vmatprep.subr.mxu0 0.0
    %241 = vmatpush2.msra.mxu0 %v34
    %242 = vmatprep.subr.mxu0 0.0
    %243 = vmatpush2.msra.mxu0 %v33
    %244 = vmatprep.subr.mxu0 0.0
    %245 = vmatpush2.msra.mxu0 %v32
    %246 = vmatprep.subr.mxu0 0.0
    %247 = vmatpush2.msra.mxu0 %v31
    %248 = vmatprep.subr.mxu0 0.0
    %249 = vmatpush2.msra.mxu0 %v30
    %250 = vmatprep.mubr.f32.mxu0 %v159
    %251 = vmatmul.mubr.f32.gmra.mxu0 %v151
    %v252 = vpop.f32.mrf.mxu0
    %v253 = vadd.f32 0.0, %v252
    %v254 = vpop.f32.mrf.mxu0
    %255 = vdwg.mxu0
    %256 = vmatprep.subr.mxu0 0.0
    %257 = vmatpush1.msra.mxu0 %v61
    %258 = vmatprep.subr.mxu0 0.0
    %259 = vmatpush1.msra.mxu0 %v60
    %260 = vmatprep.subr.mxu0 0.0
    %261 = vmatpush1.msra.mxu0 %v59
    %262 = vmatprep.subr.mxu0 0.0
    %263 = vmatpush1.msra.mxu0 %v58
    %264 = vmatprep.subr.mxu0 0.0
    %265 = vmatpush1.msra.mxu0 %v57
    %266 = vmatprep.subr.mxu0 0.0
    %267 = vmatpush1.msra.mxu0 %v56
    %268 = vmatprep.subr.mxu0 0.0
    %269 = vmatpush1.msra.mxu0 %v55
    %270 = vmatprep.subr.mxu0 0.0
    %271 = vmatpush1.msra.mxu0 %v54
    %272 = vmatprep.subr.mxu0 0.0
    %273 = vmatpush1.msra.mxu0 %v53
    %274 = vmatprep.subr.mxu0 0.0
    %275 = vmatpush1.msra.mxu0 %v52
    %276 = vmatprep.subr.mxu0 0.0
    %277 = vmatpush1.msra.mxu0 %v51
    %278 = vmatprep.subr.mxu0 0.0
    %279 = vmatpush1.msra.mxu0 %v50
    %280 = vmatprep.subr.mxu0 0.0
    %281 = vmatpush1.msra.mxu0 %v49
    %282 = vmatprep.subr.mxu0 0.0
    %283 = vmatpush1.msra.mxu0 %v48
    %284 = vmatprep.subr.mxu0 0.0
    %285 = vmatpush1.msra.mxu0 %v47
    %286 = vmatprep.subr.mxu0 0.0
    %287 = vmatpush1.msra.mxu0 %v46
    %288 = vmatprep.subr.mxu0 0.0
    %289 = vmatpush2.msra.mxu0 %v77
    %290 = vmatprep.subr.mxu0 0.0
    %291 = vmatpush2.msra.mxu0 %v76
    %292 = vmatprep.subr.mxu0 0.0
    %293 = vmatpush2.msra.mxu0 %v75
    %294 = vmatprep.subr.mxu0 0.0
    %295 = vmatpush2.msra.mxu0 %v74
    %296 = vmatprep.subr.mxu0 0.0
    %297 = vmatpush2.msra.mxu0 %v73
    %298 = vmatprep.subr.mxu0 0.0
    %299 = vmatpush2.msra.mxu0 %v72
    %300 = vmatprep.subr.mxu0 0.0
    %301 = vmatpush2.msra.mxu0 %v71
    %302 = vmatprep.subr.mxu0 0.0
    %303 = vmatpush2.msra.mxu0 %v70
    %304 = vmatprep.subr.mxu0 0.0
    %305 = vmatpush2.msra.mxu0 %v69
    %306 = vmatprep.subr.mxu0 0.0
    %307 = vmatpush2.msra.mxu0 %v68
    %308 = vmatprep.subr.mxu0 0.0
    %309 = vmatpush2.msra.mxu0 %v67
    %310 = vmatprep.subr.mxu0 0.0
    %311 = vmatpush2.msra.mxu0 %v66
    %312 = vmatprep.subr.mxu0 0.0
    %313 = vmatpush2.msra.mxu0 %v65
    %314 = vmatprep.subr.mxu0 0.0
    %315 = vmatpush2.msra.mxu0 %v64
    %316 = vmatprep.subr.mxu0 0.0
    %317 = vmatpush2.msra.mxu0 %v63
    %318 = vmatprep.subr.mxu0 0.0
    %319 = vmatpush2.msra.mxu0 %v62
    %320 = vmatprep.mubr.f32.mxu0 %v160
    %321 = vmatmul.mubr.f32.gmra.mxu0 %v158
    %v322 = vpop.f32.mrf.mxu0
    %v323 = vadd.f32 %v253, %v322
    %v324 = vpop.f32.mrf.mxu0
    %325 = vdwg.mxu0
    %326 = vmatprep.subr.mxu0 0.0
    %327 = vmatpush1.msra.mxu0 %v93
    %328 = vmatprep.subr.mxu0 0.0
    %329 = vmatpush1.msra.mxu0 %v92
    %330 = vmatprep.subr.mxu0 0.0
    %331 = vmatpush1.msra.mxu0 %v91
    %332 = vmatprep.subr.mxu0 0.0
    %333 = vmatpush1.msra.mxu0 %v90
    %334 = vmatprep.subr.mxu0 0.0
    %335 = vmatpush1.msra.mxu0 %v89
    %336 = vmatprep.subr.mxu0 0.0
    %337 = vmatpush1.msra.mxu0 %v88
    %338 = vmatprep.subr.mxu0 0.0
    %339 = vmatpush1.msra.mxu0 %v87
    %340 = vmatprep.subr.mxu0 0.0
    %341 = vmatpush1.msra.mxu0 %v86
    %342 = vmatprep.subr.mxu0 0.0
    %343 = vmatpush1.msra.mxu0 %v85
    %344 = vmatprep.subr.mxu0 0.0
    %345 = vmatpush1.msra.mxu0 %v84
    %346 = vmatprep.subr.mxu0 0.0
    %347 = vmatpush1.msra.mxu0 %v83
    %348 = vmatprep.subr.mxu0 0.0
    %349 = vmatpush1.msra.mxu0 %v82
    %350 = vmatprep.subr.mxu0 0.0
    %351 = vmatpush1.msra.mxu0 %v81
    %352 = vmatprep.subr.mxu0 0.0
    %353 = vmatpush1.msra.mxu0 %v80
    %354 = vmatprep.subr.mxu0 0.0
    %355 = vmatpush1.msra.mxu0 %v79
    %356 = vmatprep.subr.mxu0 0.0
    %357 = vmatpush1.msra.mxu0 %v78
    %358 = vmatprep.subr.mxu0 0.0
    %359 = vmatpush2.msra.mxu0 %v109
    %360 = vmatprep.subr.mxu0 0.0
    %361 = vmatpush2.msra.mxu0 %v108
    %362 = vmatprep.subr.mxu0 0.0
    %363 = vmatpush2.msra.mxu0 %v107
    %364 = vmatprep.subr.mxu0 0.0
    %365 = vmatpush2.msra.mxu0 %v106
    %366 = vmatprep.subr.mxu0 0.0
    %367 = vmatpush2.msra.mxu0 %v105
    %368 = vmatprep.subr.mxu0 0.0
    %369 = vmatpush2.msra.mxu0 %v104
    %370 = vmatprep.subr.mxu0 0.0
    %371 = vmatpush2.msra.mxu0 %v103
    %372 = vmatprep.subr.mxu0 0.0
    %373 = vmatpush2.msra.mxu0 %v102
    %374 = vmatprep.subr.mxu0 0.0
    %375 = vmatpush2.msra.mxu0 %v101
    %376 = vmatprep.subr.mxu0 0.0
    %377 = vmatpush2.msra.mxu0 %v100
    %378 = vmatprep.subr.mxu0 0.0
    %379 = vmatpush2.msra.mxu0 %v99
    %380 = vmatprep.subr.mxu0 0.0
    %381 = vmatpush2.msra.mxu0 %v98
    %382 = vmatprep.subr.mxu0 0.0
    %383 = vmatpush2.msra.mxu0 %v97
    %384 = vmatprep.subr.mxu0 0.0
    %385 = vmatpush2.msra.mxu0 %v96
    %386 = vmatprep.subr.mxu0 0.0
    %387 = vmatpush2.msra.mxu0 %v95
    %388 = vmatprep.subr.mxu0 0.0
    %389 = vmatpush2.msra.mxu0 %v94
    %390 = vmatprep.mubr.f32.mxu0 %v176
    %391 = vmatmul.mubr.f32.gmra.mxu0 %v168
    %v392 = vpop.f32.mrf.mxu0
    %v393 = vadd.f32 %v323, %v392
    %v394 = vpop.f32.mrf.mxu0
    %395 = vdwg.mxu0
    %396 = vmatprep.subr.mxu0 0.0
    %397 = vmatpush1.msra.mxu0 %v125
    %398 = vmatprep.subr.mxu0 0.0
    %399 = vmatpush1.msra.mxu0 %v124
    %400 = vmatprep.subr.mxu0 0.0
    %401 = vmatpush1.msra.mxu0 %v123
    %402 = vmatprep.subr.mxu0 0.0
    %403 = vmatpush1.msra.mxu0 %v122
    %404 = vmatprep.subr.mxu0 0.0
    %405 = vmatpush1.msra.mxu0 %v121
    %406 = vmatprep.subr.mxu0 0.0
    %407 = vmatpush1.msra.mxu0 %v120
    %408 = vmatprep.subr.mxu0 0.0
    %409 = vmatpush1.msra.mxu0 %v119
    %410 = vmatprep.subr.mxu0 0.0
    %411 = vmatpush1.msra.mxu0 %v118
    %412 = vmatprep.subr.mxu0 0.0
    %413 = vmatpush1.msra.mxu0 %v117
    %414 = vmatprep.subr.mxu0 0.0
    %415 = vmatpush1.msra.mxu0 %v116
    %416 = vmatprep.subr.mxu0 0.0
    %417 = vmatpush1.msra.mxu0 %v115
    %418 = vmatprep.subr.mxu0 0.0
    %419 = vmatpush1.msra.mxu0 %v114
    %420 = vmatprep.subr.mxu0 0.0
    %421 = vmatpush1.msra.mxu0 %v113
    %422 = vmatprep.subr.mxu0 0.0
    %423 = vmatpush1.msra.mxu0 %v112
    %424 = vmatprep.subr.mxu0 0.0
    %425 = vmatpush1.msra.mxu0 %v111
    %426 = vmatprep.subr.mxu0 0.0
    %427 = vmatpush1.msra.mxu0 %v110
    %428 = vmatprep.subr.mxu0 0.0
    %429 = vmatpush2.msra.mxu0 %v141
    %430 = vmatprep.subr.mxu0 0.0
    %431 = vmatpush2.msra.mxu0 %v140
    %432 = vmatprep.subr.mxu0 0.0
    %433 = vmatpush2.msra.mxu0 %v139
    %434 = vmatprep.subr.mxu0 0.0
    %435 = vmatpush2.msra.mxu0 %v138
    %436 = vmatprep.subr.mxu0 0.0
    %437 = vmatpush2.msra.mxu0 %v137
    %438 = vmatprep.subr.mxu0 0.0
    %439 = vmatpush2.msra.mxu0 %v136
    %440 = vmatprep.subr.mxu0 0.0
    %441 = vmatpush2.msra.mxu0 %v135
    %442 = vmatprep.subr.mxu0 0.0
    %443 = vmatpush2.msra.mxu0 %v134
    %444 = vmatprep.subr.mxu0 0.0
    %445 = vmatpush2.msra.mxu0 %v133
    %446 = vmatprep.subr.mxu0 0.0
    %447 = vmatpush2.msra.mxu0 %v132
    %448 = vmatprep.subr.mxu0 0.0
    %449 = vmatpush2.msra.mxu0 %v131
    %450 = vmatprep.subr.mxu0 0.0
    %451 = vmatpush2.msra.mxu0 %v130
    %452 = vmatprep.subr.mxu0 0.0
    %453 = vmatpush2.msra.mxu0 %v129
    %454 = vmatprep.subr.mxu0 0.0
    %455 = vmatpush2.msra.mxu0 %v128
    %456 = vmatprep.subr.mxu0 0.0
    %457 = vmatpush2.msra.mxu0 %v127
    %458 = vmatprep.subr.mxu0 0.0
    %459 = vmatpush2.msra.mxu0 %v126
    %460 = vmatprep.mubr.f32.mxu0 %v177
    %461 = vmatmul.mubr.f32.gmra.mxu0 %v175
    %v462 = vpop.f32.mrf.mxu0
    %v463 = vadd.f32 %v393, %v462
    %v464 = vpop.f32.mrf.mxu0
    %465 = vdwg.mxu0
    %v466 = vmul.f32 %v463, 0.03125
    %vm467 = vcmask 254976
    %468 = vst.msk [vmem:[#allocation2] sm:$0x3] %vm467, %v466
    // Predicated region
    $region10: #{tpu_custom_call.1} parent=1 // pred_check
      _
    $region11: #{tpu_custom_call.1} parent=1 // pred_check_branch
      %470 = sbr.rel (0) target = $region13
    $region12: #{tpu_custom_call.1} parent=1 // pred_region
      %s472 = ssub.s32 32, 32
      %473 = vsyncadd [#allocation3], %s472
      %s475 = sshll.u32 [#allocation2], 4
      %s476 = int_to_ptr.vmem [resolvable:$true] %s475
      %478 = dma.vmem_to_hbm [thread:$0]  %s476, 32, %s2, [#allocation3]
    $region13: #{tpu_custom_call.1} parent=1 // pred_fallthru
      _
    // Predicated region
    $region14: #{tpu_custom_call.1} parent=1 // pred_check
      _
    $region15: #{tpu_custom_call.1} parent=1 // pred_check_branch
      %480 = sbr.rel (0) target = $region17
    $region16: #{tpu_custom_call.1} parent=1 // pred_region
      %481 = dma.done [#allocation3], 32
    $region17: #{tpu_custom_call.1} parent=1 // pred_fallthru
      _
    %482 = vsyncpa [#allocation3], 1

</llo_original>
